<compile_context>
chip_gen: v7x
topology: tpu7x:2x2x1
jax: 0.10.0
libtpu: 0.0.40
codegen_flags: <defaults>
</compile_context>

<pallas_src>
import math
from functools import partial
from typing import NamedTuple

import numpy as np

import jax
import jax.numpy as jnp
from jax.experimental import pallas as pl
from jax.experimental.pallas import tpu as pltpu


# ---------------------------------------------------------------------------
# Host-side plan construction (done once, outside the hot path).
# ---------------------------------------------------------------------------

def _build_sampling_matrix_np(polar_size, cart_size, center_drop_grid_size=3.0):
    """Mirror Cart2Polar.__init__ (mode='in') + grid_sample index math.

    Returns St: (Hc*Wc, P) float32 bilinear sampling matrix
    (align_corners=True, padding_mode='zeros').  Column p holds the <=4
    bilinear corner weights for polar cell p (row-major over (Hp, Wp)).
    """
    Hp, Wp = polar_size
    Hc, Wc = cart_size
    cart0 = float(cart_size[0])
    cd = float(center_drop_grid_size)

    yy, xx = np.meshgrid(np.arange(Hp, dtype=np.float32),
                         np.arange(Wp, dtype=np.float32), indexing="ij")
    theta = math.pi - xx / float(Wp) * math.pi * 2.0
    radial = (Hp - 0.5 - yy + cd) / (Hp + cd) * cart0 / 2.0
    index_x = radial * np.cos(theta) + cart0 / 2.0
    index_y = radial * np.sin(theta) + cart0 / 2.0

    # grid_sample normalized coords; align_corners=True un-normalization.
    gx = index_x / cart0 * 2.0 - 1.0          # indexes width  (Wc)
    gy = index_y / cart0 * 2.0 - 1.0          # indexes height (Hc)
    xf = ((gx + 1.0) * 0.5 * (Wc - 1)).reshape(-1)
    yf = ((gy + 1.0) * 0.5 * (Hc - 1)).reshape(-1)
    P = Hp * Wp

    x0 = np.floor(xf).astype(np.int64)
    y0 = np.floor(yf).astype(np.int64)
    wx1 = xf - x0
    wy1 = yf - y0
    x1 = x0 + 1
    y1 = y0 + 1

    corners = [
        (y0, x0, (1.0 - wy1) * (1.0 - wx1)),
        (y0, x1, (1.0 - wy1) * wx1),
        (y1, x0, wy1 * (1.0 - wx1)),
        (y1, x1, wy1 * wx1),
    ]

    S = np.zeros((P, Hc * Wc), dtype=np.float32)
    rows = np.arange(P)
    for yi, xi, w in corners:
        valid = (yi >= 0) & (yi < Hc) & (xi >= 0) & (xi < Wc)
        col = np.clip(yi, 0, Hc - 1) * Wc + np.clip(xi, 0, Wc - 1)
        np.add.at(S, (rows, col), np.where(valid, w, 0.0).astype(np.float32))
    return S.T  # (Hc*Wc, P)


def _pick_tile(dim, target):
    """Largest multiple of 128 <= target that divides dim, else the full dim."""
    t = min(int(target), int(dim))
    t -= t % 128
    while t >= 128 and dim % t != 0:
        t -= 128
    return t if t >= 128 else int(dim)


class Cart2PolarPlan(NamedTuple):
    St: jax.Array             # (HW, P) sampling matrix, compute dtype (bf16)
    kblock_ids: jax.Array     # (num_p_tiles, max_k) int32 K-block schedule
    kblock_counts: jax.Array  # (num_p_tiles,) int32 valid entries per row
    tile_k: int
    tile_n: int
    nnz_blocks: int           # total K-blocks streamed (for cost estimate)


def build_cart2polar_plan(polar_size, cart_size, center_drop_grid_size=3.0,
                          mode="in", compute_dtype=jnp.bfloat16,
                          tile_k=2048, tile_n=2048):
    if mode != "in":
        # The reshape shortcut in cart2polar_forward (scatter == row-major
        # reshape over the full polar grid) only holds for mode='in'.
        # TODO(synk): mode='out' needs the masked-subset scatter epilogue.
        raise NotImplementedError("Only mode='in' is implemented.")

    St_f32 = _build_sampling_matrix_np(polar_size, cart_size,
                                       center_drop_grid_size)   # (HW, P) f32
    HW, P = St_f32.shape
    tk = _pick_tile(HW, tile_k)
    tn = _pick_tile(P, tile_n)
    nkb, npb = HW // tk, P // tn

    # Block-sparsity schedule: for each P-tile, the K-blocks of S containing
    # at least one nonzero (bilinear => <=4 nnz per column, and a P-tile only
    # touches a compact annulus/wedge of the cart image).
    blk_nz = (St_f32.reshape(nkb, tk, npb, tn) != 0.0).any(axis=(1, 3))
    counts = blk_nz.sum(axis=0).astype(np.int32)                 # (npb,)
    max_k = max(int(counts.max()), 1)
    ids = np.zeros((npb, max_k), dtype=np.int32)
    for j in range(npb):
        nz = np.nonzero(blk_nz[:, j])[0].astype(np.int32)
        ids[j, :nz.size] = nz
        if nz.size < max_k:
            # Padding entries point at a valid block but are gated off
            # in-kernel via kblock_counts.
            ids[j, nz.size:] = nz[-1] if nz.size else 0

    return Cart2PolarPlan(
        St=jnp.asarray(St_f32, dtype=compute_dtype),
        kblock_ids=jnp.asarray(ids),
        kblock_counts=jnp.asarray(counts),
        tile_k=tk, tile_n=tn, nnz_blocks=int(counts.sum()))


# ---------------------------------------------------------------------------
# Pallas kernels.
# ---------------------------------------------------------------------------

def _dense_kernel(g_ref, s_ref, o_ref, *, compute_dtype):
    # g_ref: (M, HW) f32   s_ref: (HW, P) bf16   o_ref: (M, P) out dtype
    g = g_ref[...].astype(compute_dtype)          # cast in-kernel (free, VPU)
    acc = jnp.dot(g, s_ref[...], preferred_element_type=jnp.float32)
    o_ref[...] = acc.astype(o_ref.dtype)          # output cast in epilogue


def _block_sparse_kernel(ids_ref, counts_ref, g_ref, s_ref, o_ref, acc_ref, *,
                         compute_dtype):
    # ids_ref/counts_ref: SMEM scalar-prefetch schedule (ids only used in
    # index_maps).  g_ref: (M, tk) f32, s_ref: (tk, tn) bf16,
    # o_ref: (M, tn) out dtype, acc_ref: (M, tn) f32 VMEM scratch.
    del ids_ref
    j = pl.program_id(0)
    k = pl.program_id(1)

    @pl.when(k == 0)
    def _init():
        acc_ref[...] = jnp.zeros_like(acc_ref)

    @pl.when(k < counts_ref[j])          # skip padded K-steps for this P-tile
    def _accumulate():
        g = g_ref[...].astype(compute_dtype)
        acc_ref[...] += jnp.dot(g, s_ref[...],
                                preferred_element_type=jnp.float32)

    @pl.when(k == pl.num_programs(1) - 1)
    def _finalize():
        o_ref[...] = acc_ref[...].astype(o_ref.dtype)


def _tiled_block_sparse_matmul(grid_flat, plan, out_dtype):
    M, HW = grid_flat.shape
    P = plan.St.shape[1]
    tk, tn = plan.tile_k, plan.tile_n
    npb, max_k = plan.kblock_ids.shape

    s_item = plan.St.dtype.itemsize
    out_item = jnp.dtype(out_dtype).itemsize
    # Double-buffered input/output tiles + f32 accumulator; keep a safety
    # factor and cap at 48 MiB (fits v7x's 64 MiB physical VMEM).
    vmem_need = (2 * (M * tk * 4 + tk * tn * s_item)
                 + 2 * M * tn * out_item
                 + M * tn * 4)
    vmem_limit = int(min(max(2 * vmem_need, 32 << 20), 48 << 20))

    grid_spec = pltpu.PrefetchScalarGridSpec(
        num_scalar_prefetch=2,
        grid=(npb, max_k),                      # reduction (K) axis last
        in_specs=[
            pl.BlockSpec((M, tk), lambda j, k, ids, cnt: (0, ids[j, k])),
            pl.BlockSpec((tk, tn), lambda j, k, ids, cnt: (ids[j, k], j)),
        ],
        out_specs=pl.BlockSpec((M, tn), lambda j, k, ids, cnt: (0, j)),
        scratch_shapes=[pltpu.VMEM((M, tn), jnp.float32)],
    )

    return pl.pallas_call(
        partial(_block_sparse_kernel, compute_dtype=plan.St.dtype),
        out_shape=jax.ShapeDtypeStruct((M, P), out_dtype),
        grid_spec=grid_spec,
        compiler_params=pltpu.CompilerParams(
            # P axis parallel (shards across v7x's 2 TCs); K axis arbitrary
            # (accumulator residency across it).
            dimension_semantics=("parallel", "arbitrary"),
            vmem_limit_bytes=vmem_limit),
        cost_estimate=pl.CostEstimate(
            flops=2 * M * tk * tn * plan.nnz_blocks,
            transcendentals=0,
            bytes_accessed=(plan.nnz_blocks * (M * tk * 4 + tk * tn * s_item)
                            + M * P * out_item)),
    )(plan.kblock_ids, plan.kblock_counts, grid_flat, plan.St)


# ---------------------------------------------------------------------------
# Forward wrapper (matches Cart2Polar(mode='in').forward semantics).
# ---------------------------------------------------------------------------

def cart2polar_forward(grid_feat, ref_feat, plan, *, force_tiled=False):
    """grid_feat: (B, C, Hc, Wc), ref_feat: (B, C, Hp, Wp).

    mode='in' scatters the grid_sample result into an exhaustive row-major
    enumeration of the polar grid, so the PyTorch advanced-index assignment is
    exactly a reshape; the output never depends on ref_feat's values (only its
    shape/dtype).
    """
    B, C, Hc, Wc = grid_feat.shape
    _, _, Hp, Wp = ref_feat.shape
    HW, P = Hc * Wc, Hp * Wp
    assert plan.St.shape == (HW, P), "plan was built for different grid sizes"

    M = B * C
    grid_flat = grid_feat.reshape(M, HW)     # stays f32; cast happens in-kernel
    out_dtype = ref_feat.dtype

    s_bytes = HW * P * plan.St.dtype.itemsize
    small = (s_bytes + M * HW * 4 + M * P * 4) <= (4 << 20)

    if small and not force_tiled:
        # Gridless single-VMEM-residency matmul (per-step pipeline overhead
        # would dominate at these sizes).
        sampled = pl.pallas_call(
            partial(_dense_kernel, compute_dtype=plan.St.dtype),
            out_shape=jax.ShapeDtypeStruct((M, P), out_dtype),
            cost_estimate=pl.CostEstimate(
                flops=2 * M * HW * P,
                transcendentals=0,
                bytes_accessed=(M * HW * 4 + s_bytes
                                + M * P * jnp.dtype(out_dtype).itemsize)),
        )(grid_flat, plan.St)
    else:
        # Block-sparse tiled path: stream only the nonzero K-blocks of S.
        sampled = _tiled_block_sparse_matmul(grid_flat, plan, out_dtype)

    return sampled.reshape(B, C, Hp, Wp)


# ---------------------------------------------------------------------------
# Self-test.
# ---------------------------------------------------------------------------

if __name__ == "__main__":
    B, C = 2, 4
    key = jax.random.PRNGKey(0)
    k1, k2, k3 = jax.random.split(key, 3)

    # --- 1) Small size: gridless single-matmul path. ----------------------
    polar_size = cart_size = (16, 16)
    grid_feat = jax.random.normal(k1, (B, C, *cart_size), dtype=jnp.float32)
    ref_feat = jax.random.normal(k2, (B, C, *polar_size), dtype=jnp.float32)

    plan = build_cart2polar_plan(polar_size, cart_size,
                                 center_drop_grid_size=3.0)
    out = jax.block_until_ready(cart2polar_forward(grid_feat, ref_feat, plan))

    St_f32 = _build_sampling_matrix_np(polar_size, cart_size, 3.0)
    ref_out = jnp.einsum("bcq,qp->bcp", grid_feat.reshape(B, C, -1),
                         jnp.asarray(St_f32)).reshape(B, C, *polar_size)
    assert out.shape == ref_feat.shape and out.dtype == ref_feat.dtype
    # bf16 S / bf16 grid operands -> relaxed tolerance vs the f32 reference.
    assert jnp.allclose(out, ref_out, atol=5e-2, rtol=1e-2), \
        "dense-path kernel mismatch vs reference"

    # --- 2) Larger grid, forced through the tiled block-sparse path. ------
    polar_size2 = cart_size2 = (32, 32)
    grid_feat2 = jax.random.normal(k3, (B, C, *cart_size2), dtype=jnp.float32)
    ref_feat2 = jnp.zeros((B, C, *polar_size2), dtype=jnp.float32)
    plan2 = build_cart2polar_plan(polar_size2, cart_size2, 3.0,
                                  tile_k=128, tile_n=128)
    out2 = jax.block_until_ready(
        cart2polar_forward(grid_feat2, ref_feat2, plan2, force_tiled=True))

    St2_f32 = _build_sampling_matrix_np(polar_size2, cart_size2, 3.0)
    ref_out2 = jnp.einsum("bcq,qp->bcp", grid_feat2.reshape(B, C, -1),
                          jnp.asarray(St2_f32)).reshape(B, C, *polar_size2)
    assert out2.shape == ref_feat2.shape
    assert jnp.allclose(out2, ref_out2, atol=5e-2, rtol=1e-2), \
        "block-sparse-path kernel mismatch vs reference"

    print("KERNEL_OK")
</pallas_src>

<mosaic_0001>
module attributes {stable_mosaic.version = 11 : i64} {
  func.func @_dense_kernel(%arg0: memref<8x256xf32, #tpu.memory_space<vmem>>, %arg1: memref<256x256xbf16, #tpu.memory_space<vmem>>, %arg2: memref<8x256xf32, #tpu.memory_space<vmem>>) attributes {dimension_semantics = [], scalar_prefetch = 0 : i64, scratch_operands = 0 : i64, tpu.core_type = #tpu.core_type<tc>} {
    %c0 = arith.constant 0 : index
    %c0_0 = arith.constant 0 : index
    %0 = vector.load %arg0[%c0, %c0_0] : memref<8x256xf32, #tpu.memory_space<vmem>>, vector<8x256xf32>
    %1 = arith.truncf %0 : vector<8x256xf32> to vector<8x256xbf16>
    %c0_1 = arith.constant 0 : index
    %c0_2 = arith.constant 0 : index
    %2 = vector.load %arg1[%c0_1, %c0_2] : memref<256x256xbf16, #tpu.memory_space<vmem>>, vector<256x256xbf16>
    %cst = arith.constant dense<0.000000e+00> : vector<8x256xf32>
    %3 = tpu.matmul %1, %2, %cst {dimension_numbers = #tpu.dot_dimension_numbers<[1], [0], [0], [1], [0, 0, 1, 1], [], []>} : vector<8x256xbf16>, vector<256x256xbf16>, vector<8x256xf32> -> vector<8x256xf32>
    %c0_3 = arith.constant 0 : index
    %c0_4 = arith.constant 0 : index
    %4 = vector.load %arg2[%c0_3, %c0_4] : memref<8x256xf32, #tpu.memory_space<vmem>>, vector<8x256xf32>
    tpu.vector_store %arg2[%c0_3, %c0_4], %3 {strides = array<i32>} : memref<8x256xf32, #tpu.memory_space<vmem>>, vector<8x256xf32>,
    return
  }
}

</mosaic_0001>

<llo_original>
// kernel: tpu_custom_call.1
$region0: #{tpu_custom_call.1}
  #allocation0 [shape = 'u32[]', space=smem, size = 0x4, offset = 0x4, fixed_abs, tag = 'smem constant byte address 0x4 - core index']
  #allocation1 [shape = 'u32[144,128]{1,0:T(1,128)}', space=vmem, size = 0x12000, scoped, tag = 'internal scratch']
  %s0 = inlined_call_operand.hbm [shape: f32[8,256], index: 0, kind: input, shape index: {}]
  %s1 = inlined_call_operand.hbm [shape: bf16[256,256], index: 1, kind: input, shape index: {}]
  %s2 = inlined_call_operand.hbm [shape: f32[8,256], index: 2, kind: output, shape index: {}]
  %s3 = sld [smem:[#allocation0]]
  $region26: #{tpu_custom_call.1} parent=0
    _
  %s5 = ssub.s32 1, %s3
  %s6 = scalar_select 0, %s5, %s3
  $region1: #{tpu_custom_call.1} parent=0
    #allocation2 [shape = 'u8[8192]{0}', space=vmem, size = 0x2000, scoped, tag = 'input window, operand 0, single buffered']
    #allocation3 [shape = 's32[1]{0}', space=sflag, size = 0x4, scoped, tag = 'scoped memory for tpu_custom_call.1']
    #allocation4 [shape = 's32[1]{0}', space=sflag, size = 0x4, scoped, tag = 'scoped memory for tpu_custom_call.1']
    #allocation5 [shape = 'u8[131072]{0}', space=vmem, size = 0x20000, scoped, tag = 'input window, operand 1, single buffered']
    #allocation6 [shape = 's32[1]{0}', space=sflag, size = 0x4, scoped, tag = 'scoped memory for tpu_custom_call.1']
    #allocation7 [shape = 'u8[8192]{0}', space=vmem, size = 0x2000, scoped, tag = 'output window, operand 0, single buffered']
    %7 = vsyncpa [#allocation3], 0
    %8 = vsyncpa [#allocation6], 0
    %9 = vsyncpa [#allocation4], 0
    // Predicated region
    $region2: #{tpu_custom_call.1} parent=1 // pred_check
      _
    $region3: #{tpu_custom_call.1} parent=1 // pred_check_branch
      %11 = sbr.rel (0) target = $region5
    $region4: #{tpu_custom_call.1} parent=1 // pred_region
      %s13 = ssub.s32 256, 256
      %14 = vsyncadd [#allocation3], %s13
      %s16 = sshll.u32 [#allocation2], 4
      %s17 = int_to_ptr.vmem [resolvable:$true] %s16
      %19 = dma.hbm_to_vmem [thread:$0]  %s0, 256, %s17, [#allocation3]
    $region5: #{tpu_custom_call.1} parent=1 // pred_fallthru
      _
    // Predicated region
    $region6: #{tpu_custom_call.1} parent=1 // pred_check
      _
    $region7: #{tpu_custom_call.1} parent=1 // pred_check_branch
      %21 = sbr.rel (0) target = $region9
    $region8: #{tpu_custom_call.1} parent=1 // pred_region
      %s23 = ssub.s32 4096, 4096
      %24 = vsyncadd [#allocation6], %s23
      %s25 = sshll.u32 [#allocation5], 4
      %s26 = int_to_ptr.vmem [resolvable:$true] %s25
      %31 = dma.hbm_to_vmem [thread:$0]  %s1, 4096, %s26, [#allocation6], 128, 128, 8
    $region9: #{tpu_custom_call.1} parent=1 // pred_fallthru
      _
    // Predicated region
    $region10: #{tpu_custom_call.1} parent=1 // pred_check
      _
    $region11: #{tpu_custom_call.1} parent=1 // pred_check_branch
      %33 = sbr.rel (0) target = $region13
    $region12: #{tpu_custom_call.1} parent=1 // pred_region
      %34 = dma.done [#allocation3], 256
    $region13: #{tpu_custom_call.1} parent=1 // pred_fallthru
      _
    // Predicated region
    $region14: #{tpu_custom_call.1} parent=1 // pred_check
      _
    $region15: #{tpu_custom_call.1} parent=1 // pred_check_branch
      %36 = sbr.rel (0) target = $region17
    $region16: #{tpu_custom_call.1} parent=1 // pred_region
      %37 = dma.done [#allocation6], 4096
    $region17: #{tpu_custom_call.1} parent=1 // pred_fallthru
      _
    %v38 = vld [vmem:[#allocation2] sm:$0xff]
    %v39 = vld [vmem:[#allocation2 + $0x8] sm:$0xff]
    %v40 = vpack.c.bf16 %v38, %v38
    %v41 = vpack.c.bf16 %v39, %v39
    %v42 = vld [vmem:[#allocation5] sm:$0xff]
    %v43 = vld [vmem:[#allocation5 + $0x8] sm:$0xff]
    %v44 = vld [vmem:[#allocation5 + $0x10] sm:$0xff]
    %v45 = vld [vmem:[#allocation5 + $0x18] sm:$0xff]
    %v46 = vld [vmem:[#allocation5 + $0x20] sm:$0xff]
    %v47 = vld [vmem:[#allocation5 + $0x28] sm:$0xff]
    %v48 = vld [vmem:[#allocation5 + $0x30] sm:$0xff]
    %v49 = vld [vmem:[#allocation5 + $0x38] sm:$0xff]
    %v50 = vld [vmem:[#allocation5 + $0x40] sm:$0xff]
    %v51 = vld [vmem:[#allocation5 + $0x48] sm:$0xff]
    %v52 = vld [vmem:[#allocation5 + $0x50] sm:$0xff]
    %v53 = vld [vmem:[#allocation5 + $0x58] sm:$0xff]
    %v54 = vld [vmem:[#allocation5 + $0x60] sm:$0xff]
    %v55 = vld [vmem:[#allocation5 + $0x68] sm:$0xff]
    %v56 = vld [vmem:[#allocation5 + $0x70] sm:$0xff]
    %v57 = vld [vmem:[#allocation5 + $0x78] sm:$0xff]
    %v58 = vld [vmem:[#allocation5 + $0x80] sm:$0xff]
    %v59 = vld [vmem:[#allocation5 + $0x88] sm:$0xff]
    %v60 = vld [vmem:[#allocation5 + $0x90] sm:$0xff]
    %v61 = vld [vmem:[#allocation5 + $0x98] sm:$0xff]
    %v62 = vld [vmem:[#allocation5 + $0xa0] sm:$0xff]
    %v63 = vld [vmem:[#allocation5 + $0xa8] sm:$0xff]
    %v64 = vld [vmem:[#allocation5 + $0xb0] sm:$0xff]
    %v65 = vld [vmem:[#allocation5 + $0xb8] sm:$0xff]
    %v66 = vld [vmem:[#allocation5 + $0xc0] sm:$0xff]
    %v67 = vld [vmem:[#allocation5 + $0xc8] sm:$0xff]
    %v68 = vld [vmem:[#allocation5 + $0xd0] sm:$0xff]
    %v69 = vld [vmem:[#allocation5 + $0xd8] sm:$0xff]
    %v70 = vld [vmem:[#allocation5 + $0xe0] sm:$0xff]
    %v71 = vld [vmem:[#allocation5 + $0xe8] sm:$0xff]
    %v72 = vld [vmem:[#allocation5 + $0xf0] sm:$0xff]
    %v73 = vld [vmem:[#allocation5 + $0xf8] sm:$0xff]
    %v106 = vunpack.c.l.b16 %v42
    %v107 = vunpack.c.h.b16 %v42
    %v108 = vunpack.c.l.b16 %v43
    %v109 = vunpack.c.h.b16 %v43
    %v110 = vunpack.c.l.b16 %v44
    %v111 = vunpack.c.h.b16 %v44
    %v112 = vunpack.c.l.b16 %v45
    %v113 = vunpack.c.h.b16 %v45
    %v114 = vunpack.c.l.b16 %v46
    %v115 = vunpack.c.h.b16 %v46
    %v116 = vunpack.c.l.b16 %v47
    %v117 = vunpack.c.h.b16 %v47
    %v118 = vunpack.c.l.b16 %v48
    %v119 = vunpack.c.h.b16 %v48
    %v120 = vunpack.c.l.b16 %v49
    %v121 = vunpack.c.h.b16 %v49
    %v122 = vunpack.c.l.b16 %v50
    %v123 = vunpack.c.h.b16 %v50
    %v124 = vunpack.c.l.b16 %v51
    %v125 = vunpack.c.h.b16 %v51
    %v126 = vunpack.c.l.b16 %v52
    %v127 = vunpack.c.h.b16 %v52
    %v128 = vunpack.c.l.b16 %v53
    %v129 = vunpack.c.h.b16 %v53
    %v130 = vunpack.c.l.b16 %v54
    %v131 = vunpack.c.h.b16 %v54
    %v132 = vunpack.c.l.b16 %v55
    %v133 = vunpack.c.h.b16 %v55
    %v134 = vunpack.c.l.b16 %v56
    %v135 = vunpack.c.h.b16 %v56
    %v136 = vunpack.c.l.b16 %v57
    %v137 = vunpack.c.h.b16 %v57
    %v138 = vunpack.c.l.b16 %v58
    %v139 = vunpack.c.h.b16 %v58
    %v140 = vunpack.c.l.b16 %v59
    %v141 = vunpack.c.h.b16 %v59
    %v142 = vunpack.c.l.b16 %v60
    %v143 = vunpack.c.h.b16 %v60
    %v144 = vunpack.c.l.b16 %v61
    %v145 = vunpack.c.h.b16 %v61
    %v146 = vunpack.c.l.b16 %v62
    %v147 = vunpack.c.h.b16 %v62
    %v148 = vunpack.c.l.b16 %v63
    %v149 = vunpack.c.h.b16 %v63
    %v150 = vunpack.c.l.b16 %v64
    %v151 = vunpack.c.h.b16 %v64
    %v152 = vunpack.c.l.b16 %v65
    %v153 = vunpack.c.h.b16 %v65
    %v154 = vunpack.c.l.b16 %v66
    %v155 = vunpack.c.h.b16 %v66
    %v156 = vunpack.c.l.b16 %v67
    %v157 = vunpack.c.h.b16 %v67
    %v158 = vunpack.c.l.b16 %v68
    %v159 = vunpack.c.h.b16 %v68
    %v160 = vunpack.c.l.b16 %v69
    %v161 = vunpack.c.h.b16 %v69
    %v162 = vunpack.c.l.b16 %v70
    %v163 = vunpack.c.h.b16 %v70
    %v164 = vunpack.c.l.b16 %v71
    %v165 = vunpack.c.h.b16 %v71
    %v166 = vunpack.c.l.b16 %v72
    %v167 = vunpack.c.h.b16 %v72
    %v168 = vunpack.c.l.b16 %v73
    %v169 = vunpack.c.h.b16 %v73
    %v170 = vpack.c.b16 %v108, %v106
    %v171 = vpack.c.b16 %v109, %v107
    %v172 = vpack.c.b16 %v112, %v110
    %v173 = vpack.c.b16 %v113, %v111
    %v174 = vpack.c.b16 %v116, %v114
    %v175 = vpack.c.b16 %v117, %v115
    %v176 = vpack.c.b16 %v120, %v118
    %v177 = vpack.c.b16 %v121, %v119
    %v178 = vpack.c.b16 %v124, %v122
    %v179 = vpack.c.b16 %v125, %v123
    %v180 = vpack.c.b16 %v128, %v126
    %v181 = vpack.c.b16 %v129, %v127
    %v182 = vpack.c.b16 %v132, %v130
    %v183 = vpack.c.b16 %v133, %v131
    %v184 = vpack.c.b16 %v136, %v134
    %v185 = vpack.c.b16 %v137, %v135
    %v186 = vpack.c.b16 %v140, %v138
    %v187 = vpack.c.b16 %v141, %v139
    %v188 = vpack.c.b16 %v144, %v142
    %v189 = vpack.c.b16 %v145, %v143
    %v190 = vpack.c.b16 %v148, %v146
    %v191 = vpack.c.b16 %v149, %v147
    %v192 = vpack.c.b16 %v152, %v150
    %v193 = vpack.c.b16 %v153, %v151
    %v194 = vpack.c.b16 %v156, %v154
    %v195 = vpack.c.b16 %v157, %v155
    %v196 = vpack.c.b16 %v160, %v158
    %v197 = vpack.c.b16 %v161, %v159
    %v198 = vpack.c.b16 %v164, %v162
    %v199 = vpack.c.b16 %v165, %v163
    %v200 = vpack.c.b16 %v168, %v166
    %v201 = vpack.c.b16 %v169, %v167
    %234 = vmatprep.subr.bf16.mxu0 %v171
    %235 = vmatpush1.bf16.msra.mxu0 %v170
    %236 = vmatprep.subr.bf16.mxu0 %v173
    %237 = vmatpush1.bf16.msra.mxu0 %v172
    %238 = vmatprep.subr.bf16.mxu0 %v175
    %239 = vmatpush1.bf16.msra.mxu0 %v174
    %240 = vmatprep.subr.bf16.mxu0 %v177
    %241 = vmatpush1.bf16.msra.mxu0 %v176
    %242 = vmatprep.subr.bf16.mxu0 %v179
    %243 = vmatpush1.bf16.msra.mxu0 %v178
    %244 = vmatprep.subr.bf16.mxu0 %v181
    %245 = vmatpush1.bf16.msra.mxu0 %v180
    %246 = vmatprep.subr.bf16.mxu0 %v183
    %247 = vmatpush1.bf16.msra.mxu0 %v182
    %248 = vmatprep.subr.bf16.mxu0 %v185
    %249 = vmatpush1.bf16.msra.mxu0 %v184
    %250 = vmatprep.subr.bf16.mxu0 %v187
    %251 = vmatpush1.bf16.msra.mxu0 %v186
    %252 = vmatprep.subr.bf16.mxu0 %v189
    %253 = vmatpush1.bf16.msra.mxu0 %v188
    %254 = vmatprep.subr.bf16.mxu0 %v191
    %255 = vmatpush1.bf16.msra.mxu0 %v190
    %256 = vmatprep.subr.bf16.mxu0 %v193
    %257 = vmatpush1.bf16.msra.mxu0 %v192
    %258 = vmatprep.subr.bf16.mxu0 %v195
    %259 = vmatpush1.bf16.msra.mxu0 %v194
    %260 = vmatprep.subr.bf16.mxu0 %v197
    %261 = vmatpush1.bf16.msra.mxu0 %v196
    %262 = vmatprep.subr.bf16.mxu0 %v199
    %263 = vmatpush1.bf16.msra.mxu0 %v198
    %264 = vmatprep.subr.bf16.mxu0 %v201
    %265 = vmatpush1.bf16.msra.mxu0 %v200
    %266 = vmatprep.mubr.bf16.mxu0 %v41
    %267 = vmatmul.mubr.bf16.gmra.mrb[0].mxu0 %v40
    %v268 = vpop.f32.mrb[0].mxu0
    %v269 = vadd.f32 0.0, %v268
    %v270 = vpop.f32.mrb[0].mxu0
    %v271 = vadd.f32 0.0, %v270
    %v272 = vpop.f32.mrb[0].mxu0
    %v273 = vpop.f32.mrb[0].mxu0
    %274 = vdwg.mxu0
    %275 = vst [vmem:[#allocation7] sm:$0xff] %v269
    %276 = vst [vmem:[#allocation7 + $0x8] sm:$0xff] %v271
    // Predicated region
    $region18: #{tpu_custom_call.1} parent=1 // pred_check
      _
    $region19: #{tpu_custom_call.1} parent=1 // pred_check_branch
      %278 = sbr.rel (0) target = $region21
    $region20: #{tpu_custom_call.1} parent=1 // pred_region
      %s280 = ssub.s32 256, 256
      %281 = vsyncadd [#allocation4], %s280
      %s283 = sshll.u32 [#allocation7], 4
      %s284 = int_to_ptr.vmem [resolvable:$true] %s283
      %286 = dma.vmem_to_hbm [thread:$0]  %s284, 256, %s2, [#allocation4]
    $region21: #{tpu_custom_call.1} parent=1 // pred_fallthru
      _
    // Predicated region
    $region22: #{tpu_custom_call.1} parent=1 // pred_check
      _
    $region23: #{tpu_custom_call.1} parent=1 // pred_check_branch
      %288 = sbr.rel (0) target = $region25
    $region24: #{tpu_custom_call.1} parent=1 // pred_region
      %289 = dma.done [#allocation4], 256
    $region25: #{tpu_custom_call.1} parent=1 // pred_fallthru
      _
    %290 = vsyncpa [#allocation3], 1
    %291 = vsyncpa [#allocation6], 1
    %292 = vsyncpa [#allocation4], 1

</llo_original>
